<compile_context>
chip_gen: v7x
topology: tpu7x:2x2x1
jax: 0.10.0
libtpu: 0.0.40
codegen_flags: <defaults>
</compile_context>

<pallas_src>
import functools

import jax
import jax.numpy as jnp
from jax import lax
from jax.experimental import pallas as pl
from jax.experimental.pallas import tpu as pltpu


# ----------------------------- Pallas kernel --------------------------------

def _linear_kernel(x_ref, w_ref, b_ref, o_ref):
    """One (tm, tn) output tile of  x @ W.T + b  in a single MXU pass.

    x_ref: (tm, K) f32     -- rows of x, full contraction dim
    w_ref: (tn, K) f32     -- rows of W (PyTorch [out, in] layout, no transpose)
    b_ref: (1, tn) f32
    o_ref: (tm, tn) f32
    """
    acc = lax.dot_general(
        x_ref[...], w_ref[...],
        dimension_numbers=(((1,), (1,)), ((), ())),   # contract last dim of both
        preferred_element_type=jnp.float32,
    )
    o_ref[...] = (acc + b_ref[...]).astype(o_ref.dtype)


# ------------------------------ Python wrapper -------------------------------

@functools.partial(jax.jit, static_argnames=("tm", "tn"))
def logreg_forward(x, weight, bias, *, tm=128, tn=128):
    """nn.Linear forward: x @ weight.T + bias.

    x:      [..., K]  (any leading batch dims)
    weight: [N, K]    (PyTorch layout, used as-is)
    bias:   [N]
    returns [..., N]
    """
    orig_shape = x.shape
    k = orig_shape[-1]
    n = weight.shape[0]

    x2 = x.reshape(-1, k).astype(jnp.float32)
    m = x2.shape[0]
    w = weight.astype(jnp.float32)

    # Lane-dense output: pad only the (tiny) bias row to a multiple of tn.
    # x and W are NOT padded or transposed; Pallas masks their ragged M / N
    # block edges, and K is a single full-extent block (no K padding at all).
    n_pad = pl.cdiv(n, tn) * tn
    b2 = jnp.pad(bias.astype(jnp.float32).reshape(1, n), ((0, 0), (0, n_pad - n)))

    grid = (pl.cdiv(m, tm), n_pad // tn)

    # Raise the scoped-VMEM limit only if the (double-buffered) working set
    # needs it; cap comfortably under v7x's 64 MiB physical VMEM.
    est_vmem = 4 * (2 * (tm * k + tn * k + tn) + 2 * tm * tn)
    cp_kwargs = dict(dimension_semantics=("parallel", "parallel"))
    if est_vmem > (12 << 20):
        cp_kwargs["vmem_limit_bytes"] = int(min(est_vmem + (8 << 20), 48 << 20))
    # NOTE: for very large hid_dim (K) you would reintroduce a K grid axis;
    # for LogReg-sized hidden dims a single full-K block is the fast path.

    out = pl.pallas_call(
        _linear_kernel,
        out_shape=jax.ShapeDtypeStruct((m, n_pad), jnp.float32),
        grid_spec=pltpu.PrefetchScalarGridSpec(
            num_scalar_prefetch=0,
            grid=grid,
            in_specs=[
                pl.BlockSpec((tm, k), lambda i, j: (i, 0)),   # x rows, full K
                pl.BlockSpec((tn, k), lambda i, j: (j, 0)),   # W rows, full K
                pl.BlockSpec((1, tn), lambda i, j: (0, j)),   # bias slice
            ],
            out_specs=pl.BlockSpec((tm, tn), lambda i, j: (i, j)),
        ),
        compiler_params=pltpu.CompilerParams(**cp_kwargs),
    )(x2, w, b2)

    out = out[:, :n]
    return out.reshape(*orig_shape[:-1], n)


# --------------------------- plain-JAX reference -----------------------------

def logreg_forward_ref(x, weight, bias):
    return x @ weight.T + bias[None, :]


def init_linear_params(key, hid_dim, out_dim):
    """Deterministic PyTorch-style uniform init (exact init is not semantic)."""
    kw, kb = jax.random.split(key)
    bound = 1.0 / (hid_dim ** 0.5)
    weight = jax.random.uniform(kw, (out_dim, hid_dim), jnp.float32, -bound, bound)
    bias = jax.random.uniform(kb, (out_dim,), jnp.float32, -bound, bound)
    return weight, bias


# ----------------------------------- main ------------------------------------

if __name__ == "__main__":
    key = jax.random.PRNGKey(0)

    # Case 1: small LogReg head (batch=32, hid_dim=64, out_dim=16).
    k1, k2, key = jax.random.split(key, 3)
    x_a = jax.random.normal(k1, (32, 64), jnp.float32)
    w_a, b_a = init_linear_params(k2, 64, 16)
    out_a = logreg_forward(x_a, w_a, b_a)
    jax.block_until_ready(out_a)
    ref_a = logreg_forward_ref(x_a, w_a, b_a)
    assert out_a.shape == ref_a.shape
    assert jnp.allclose(out_a, ref_a, atol=1e-4, rtol=1e-4)

    # Case 2: fully non-aligned shapes (batch=50, hid_dim=48, out_dim=10)
    # -> exercises the ragged M / N block edges and the lane-dense N padding.
    k3, k4, key = jax.random.split(key, 3)
    x_b = jax.random.normal(k3, (50, 48), jnp.float32)
    w_b, b_b = init_linear_params(k4, 48, 10)
    out_b = logreg_forward(x_b, w_b, b_b)
    jax.block_until_ready(out_b)
    ref_b = logreg_forward_ref(x_b, w_b, b_b)
    assert out_b.shape == ref_b.shape
    assert jnp.allclose(out_b, ref_b, atol=1e-4, rtol=1e-4)

    # Case 3: multiple row tiles (batch=200, hid_dim=96, out_dim=24) so a
    # v7x-style 2-D parallel grid has >=2 output tiles to split across cores.
    k5, k6, key = jax.random.split(key, 3)
    x_c = jax.random.normal(k5, (200, 96), jnp.float32)
    w_c, b_c = init_linear_params(k6, 96, 24)
    out_c = logreg_forward(x_c, w_c, b_c)
    jax.block_until_ready(out_c)
    ref_c = logreg_forward_ref(x_c, w_c, b_c)
    assert jnp.allclose(out_c, ref_c, atol=1e-4, rtol=1e-4)

    print("KERNEL_OK")
</pallas_src>

<mosaic_0001>
module attributes {stable_mosaic.version = 11 : i64} {
  func.func @_linear_kernel(%arg0: i32, %arg1: i32, %arg2: memref<128x64xf32, #tpu.memory_space<vmem>>, %arg3: memref<128x64xf32, #tpu.memory_space<vmem>>, %arg4: memref<1x128xf32, #tpu.memory_space<vmem>>, %arg5: memref<128x128xf32, #tpu.memory_space<vmem>>) attributes {dimension_semantics = [#tpu.dimension_semantics<parallel>, #tpu.dimension_semantics<parallel>], iteration_bounds = array<i64: 1, 1>, scalar_prefetch = 0 : i64, scratch_operands = 0 : i64, tpu.core_type = #tpu.core_type<tc>, window_params = [{transform_indices = @transform_0, window_bounds = array<i64: 128, 64>}, {transform_indices = @transform_1, window_bounds = array<i64: 128, 64>}, {transform_indices = @transform_2, window_bounds = array<i64: 1, 128>}, {transform_indices = @transform_3, window_bounds = array<i64: 128, 128>}]} {
    %c0 = arith.constant 0 : index
    %c0_0 = arith.constant 0 : index
    %0 = vector.load %arg2[%c0, %c0_0] : memref<128x64xf32, #tpu.memory_space<vmem>>, vector<128x64xf32>
    %c0_1 = arith.constant 0 : index
    %c0_2 = arith.constant 0 : index
    %1 = vector.load %arg3[%c0_1, %c0_2] : memref<128x64xf32, #tpu.memory_space<vmem>>, vector<128x64xf32>
    %cst = arith.constant dense<0.000000e+00> : vector<128x128xf32>
    %2 = tpu.matmul %0, %1, %cst {dimension_numbers = #tpu.dot_dimension_numbers<[1], [1], [0], [0], [0, 0, 1, 0], [], []>} : vector<128x64xf32>, vector<128x64xf32>, vector<128x128xf32> -> vector<128x128xf32>
    %c0_3 = arith.constant 0 : index
    %c0_4 = arith.constant 0 : index
    %3 = vector.load %arg4[%c0_3, %c0_4] : memref<1x128xf32, #tpu.memory_space<vmem>>, vector<1x128xf32>
    %4 = vector.broadcast %3 : vector<1x128xf32> to vector<128x128xf32>
    %5 = arith.addf %2, %4 : vector<128x128xf32>
    %c0_5 = arith.constant 0 : index
    %c0_6 = arith.constant 0 : index
    %6 = vector.load %arg5[%c0_5, %c0_6] : memref<128x128xf32, #tpu.memory_space<vmem>>, vector<128x128xf32>
    tpu.vector_store %arg5[%c0_5, %c0_6], %5 {strides = array<i32>} : memref<128x128xf32, #tpu.memory_space<vmem>>, vector<128x128xf32>,
    return
  }
  func.func @transform_0(%arg0: i32, %arg1: i32) -> (i32, i32) {
    %c0_i32 = arith.constant 0 : i32
    %c0_i32_0 = arith.constant 0 : i32
    return %arg0, %c0_i32 : i32, i32
  }
  func.func @transform_1(%arg0: i32, %arg1: i32) -> (i32, i32) {
    %c0_i32 = arith.constant 0 : i32
    %c0_i32_0 = arith.constant 0 : i32
    return %arg1, %c0_i32 : i32, i32
  }
  func.func @transform_2(%arg0: i32, %arg1: i32) -> (i32, i32) {
    %c0_i32 = arith.constant 0 : i32
    %c0_i32_0 = arith.constant 0 : i32
    return %c0_i32, %arg1 : i32, i32
  }
  func.func @transform_3(%arg0: i32, %arg1: i32) -> (i32, i32) {
    %c0_i32 = arith.constant 0 : i32
    return %arg0, %arg1 : i32, i32
  }
}

</mosaic_0001>

<llo_original>
// kernel: logreg_forward.1
$region0: #{logreg_forward.1}
  #allocation0 [shape = 'u32[]', space=smem, size = 0x4, offset = 0x4, fixed_abs, tag = 'smem constant byte address 0x4 - core index']
  #allocation1 [shape = 'u32[144,128]{1,0:T(1,128)}', space=vmem, size = 0x12000, scoped, tag = 'internal scratch']
  %s0 = inlined_call_operand.hbm [shape: f32[32,64], index: 0, kind: input, shape index: {}]
  %s1 = inlined_call_operand.hbm [shape: f32[16,64], index: 1, kind: input, shape index: {}]
  %s2 = inlined_call_operand.vmem [shape: f32[1,128], index: 2, kind: input, shape index: {}]
  %s3 = inlined_call_operand.vmem [shape: f32[32,128], index: 3, kind: output, shape index: {}]
  %s4 = sld [smem:[#allocation0]]
  $region64: #{logreg_forward.1} parent=0
    _
  %s6 = ssub.s32 1, %s4
  %s7 = scalar_select 0, %s6, %s4
  $region1: #{logreg_forward.1} parent=0
    #allocation2 [shape = 'u8[65536]{0}', space=vmem, size = 0x10000, scoped, tag = 'input window, operand 0, single buffered']
    #allocation3 [shape = 's32[1]{0}', space=sflag, size = 0x4, scoped, tag = 'scoped memory for logreg_forward.1']
    #allocation4 [shape = 'u8[65536]{0}', space=vmem, size = 0x10000, scoped, tag = 'input window, operand 1, single buffered']
    #allocation5 [shape = 's32[1]{0}', space=sflag, size = 0x4, scoped, tag = 'scoped memory for logreg_forward.1']
    #allocation6 [shape = 'u8[65536]{0}', space=vmem, size = 0x10000, scoped, tag = 'output window, operand 0, single buffered']
    %8 = vsyncpa [#allocation3], 0
    %9 = vsyncpa [#allocation5], 0
    // Predicated region
    $region2: #{logreg_forward.1} parent=1 // pred_check
      _
    $region3: #{logreg_forward.1} parent=1 // pred_check_branch
      %11 = sbr.rel (0) target = $region5
    $region4: #{logreg_forward.1} parent=1 // pred_region
      %s13 = ssub.s32 2048, 512
      %14 = vsyncadd [#allocation3], %s13
      %s15 = sshll.u32 [#allocation2], 4
      %s16 = int_to_ptr.vmem [resolvable:$true] %s15
      %21 = dma.hbm_to_vmem [thread:$0]  %s0, 512, %s16, [#allocation3], 128, 128, 8
    $region5: #{logreg_forward.1} parent=1 // pred_fallthru
      _
    // Predicated region
    $region6: #{logreg_forward.1} parent=1 // pred_check
      _
    $region7: #{logreg_forward.1} parent=1 // pred_check_branch
      %23 = sbr.rel (0) target = $region9
    $region8: #{logreg_forward.1} parent=1 // pred_region
      %s25 = ssub.s32 2048, 256
      %26 = vsyncadd [#allocation5], %s25
      %s27 = sshll.u32 [#allocation4], 4
      %s28 = int_to_ptr.vmem [resolvable:$true] %s27
      %33 = dma.hbm_to_vmem [thread:$0]  %s1, 256, %s28, [#allocation5], 128, 128, 8
    $region9: #{logreg_forward.1} parent=1 // pred_fallthru
      _
    // Predicated region
    $region10: #{logreg_forward.1} parent=1 // pred_check
      _
    $region11: #{logreg_forward.1} parent=1 // pred_check_branch
      %35 = sbr.rel (0) target = $region13
    $region12: #{logreg_forward.1} parent=1 // pred_region
      _
    $region13: #{logreg_forward.1} parent=1 // pred_fallthru
      _
    // Predicated region
    $region14: #{logreg_forward.1} parent=1 // pred_check
      _
    $region15: #{logreg_forward.1} parent=1 // pred_check_branch
      %37 = sbr.rel (0) target = $region17
    $region16: #{logreg_forward.1} parent=1 // pred_region
      %38 = dma.done [#allocation3], 2048
    $region17: #{logreg_forward.1} parent=1 // pred_fallthru
      _
    // Predicated region
    $region18: #{logreg_forward.1} parent=1 // pred_check
      _
    $region19: #{logreg_forward.1} parent=1 // pred_check_branch
      %40 = sbr.rel (0) target = $region21
    $region20: #{logreg_forward.1} parent=1 // pred_region
      %41 = dma.done [#allocation5], 2048
    $region21: #{logreg_forward.1} parent=1 // pred_fallthru
      _
    %v42 = vld [vmem:[#allocation2] sm:$0xff]
    %v43 = vld [vmem:[#allocation2 + $0x8] sm:$0xff]
    %v44 = vld [vmem:[#allocation2 + $0x10] sm:$0xff]
    %v45 = vld [vmem:[#allocation2 + $0x18] sm:$0xff]
    %v46 = vld [vmem:[#allocation2 + $0x20] sm:$0xff]
    %v47 = vld [vmem:[#allocation2 + $0x28] sm:$0xff]
    %v48 = vld [vmem:[#allocation2 + $0x30] sm:$0xff]
    %v49 = vld [vmem:[#allocation2 + $0x38] sm:$0xff]
    %v50 = vld [vmem:[#allocation2 + $0x40] sm:$0xff]
    %v51 = vld [vmem:[#allocation2 + $0x48] sm:$0xff]
    %v52 = vld [vmem:[#allocation2 + $0x50] sm:$0xff]
    %v53 = vld [vmem:[#allocation2 + $0x58] sm:$0xff]
    %v54 = vld [vmem:[#allocation2 + $0x60] sm:$0xff]
    %v55 = vld [vmem:[#allocation2 + $0x68] sm:$0xff]
    %v56 = vld [vmem:[#allocation2 + $0x70] sm:$0xff]
    %v57 = vld [vmem:[#allocation2 + $0x78] sm:$0xff]
    %v58 = vld [vmem:[#allocation4] sm:$0xff]
    %v59 = vld [vmem:[#allocation4 + $0x8] sm:$0xff]
    %v60 = vld [vmem:[#allocation4 + $0x10] sm:$0xff]
    %v61 = vld [vmem:[#allocation4 + $0x18] sm:$0xff]
    %v62 = vld [vmem:[#allocation4 + $0x20] sm:$0xff]
    %v63 = vld [vmem:[#allocation4 + $0x28] sm:$0xff]
    %v64 = vld [vmem:[#allocation4 + $0x30] sm:$0xff]
    %v65 = vld [vmem:[#allocation4 + $0x38] sm:$0xff]
    %v66 = vld [vmem:[#allocation4 + $0x40] sm:$0xff]
    %v67 = vld [vmem:[#allocation4 + $0x48] sm:$0xff]
    %v68 = vld [vmem:[#allocation4 + $0x50] sm:$0xff]
    %v69 = vld [vmem:[#allocation4 + $0x58] sm:$0xff]
    %v70 = vld [vmem:[#allocation4 + $0x60] sm:$0xff]
    %v71 = vld [vmem:[#allocation4 + $0x68] sm:$0xff]
    %v72 = vld [vmem:[#allocation4 + $0x70] sm:$0xff]
    %v73 = vld [vmem:[#allocation4 + $0x78] sm:$0xff]
    %v74 = vld [vmem:[%s2] sm:$0x1]
    %v76 = vlaneseq
    %v77 = vshrl.u32 %v76, 7
    %v78 = vsub.s32 0, %v77
    %v79 = vrot.slane %v74, %v78
    %vm81 = vcmask 523264
    %v83 = vsel %vm81, %v42, 0
    %v86 = vsel %vm81, %v43, 0
    %v89 = vsel %vm81, %v44, 0
    %v92 = vsel %vm81, %v45, 0
    %v95 = vsel %vm81, %v46, 0
    %v98 = vsel %vm81, %v47, 0
    %v101 = vsel %vm81, %v48, 0
    %v104 = vsel %vm81, %v49, 0
    %v107 = vsel %vm81, %v50, 0
    %v110 = vsel %vm81, %v51, 0
    %v113 = vsel %vm81, %v52, 0
    %v116 = vsel %vm81, %v53, 0
    %v119 = vsel %vm81, %v54, 0
    %v122 = vsel %vm81, %v55, 0
    %v125 = vsel %vm81, %v56, 0
    %v128 = vsel %vm81, %v57, 0
    %v131 = vsel %vm81, %v58, 0
    %v134 = vsel %vm81, %v59, 0
    %v137 = vsel %vm81, %v60, 0
    %v140 = vsel %vm81, %v61, 0
    %v143 = vsel %vm81, %v62, 0
    %v146 = vsel %vm81, %v63, 0
    %v149 = vsel %vm81, %v64, 0
    %v152 = vsel %vm81, %v65, 0
    %v155 = vsel %vm81, %v66, 0
    %v158 = vsel %vm81, %v67, 0
    %v161 = vsel %vm81, %v68, 0
    %v164 = vsel %vm81, %v69, 0
    %v167 = vsel %vm81, %v70, 0
    %v170 = vsel %vm81, %v71, 0
    %v173 = vsel %vm81, %v72, 0
    %v176 = vsel %vm81, %v73, 0
    %178 = vmatprep.subr.mxu0 0.0
    %179 = vmatpush1.xpose.msra.mxu0 %v131
    %180 = vmatprep.subr.mxu0 0.0
    %181 = vmatpush1.xpose.msra.mxu0 %v134
    %182 = vmatprep.subr.mxu0 0.0
    %183 = vmatpush1.xpose.msra.mxu0 %v137
    %184 = vmatprep.subr.mxu0 0.0
    %185 = vmatpush1.xpose.msra.mxu0 %v140
    %186 = vmatprep.subr.mxu0 0.0
    %187 = vmatpush1.xpose.msra.mxu0 %v143
    %188 = vmatprep.subr.mxu0 0.0
    %189 = vmatpush1.xpose.msra.mxu0 %v146
    %190 = vmatprep.subr.mxu0 0.0
    %191 = vmatpush1.xpose.msra.mxu0 %v149
    %192 = vmatprep.subr.mxu0 0.0
    %193 = vmatpush1.xpose.msra.mxu0 %v152
    %194 = vmatprep.subr.mxu0 0.0
    %195 = vmatpush1.xpose.msra.mxu0 %v155
    %196 = vmatprep.subr.mxu0 0.0
    %197 = vmatpush1.xpose.msra.mxu0 %v158
    %198 = vmatprep.subr.mxu0 0.0
    %199 = vmatpush1.xpose.msra.mxu0 %v161
    %200 = vmatprep.subr.mxu0 0.0
    %201 = vmatpush1.xpose.msra.mxu0 %v164
    %202 = vmatprep.subr.mxu0 0.0
    %203 = vmatpush1.xpose.msra.mxu0 %v167
    %204 = vmatprep.subr.mxu0 0.0
    %205 = vmatpush1.xpose.msra.mxu0 %v170
    %206 = vmatprep.subr.mxu0 0.0
    %207 = vmatpush1.xpose.msra.mxu0 %v173
    %208 = vmatprep.subr.mxu0 0.0
    %209 = vmatpush1.xpose.msra.mxu0 %v176
    %210 = vmatprep.subr.mxu0 0.0
    %211 = vmatpush1.xpose.msra.mxu0 0.0
    %212 = vmatprep.subr.mxu0 0.0
    %213 = vmatpush1.xpose.msra.mxu0 0.0
    %214 = vmatprep.subr.mxu0 0.0
    %215 = vmatpush1.xpose.msra.mxu0 0.0
    %216 = vmatprep.subr.mxu0 0.0
    %217 = vmatpush1.xpose.msra.mxu0 0.0
    %218 = vmatprep.subr.mxu0 0.0
    %219 = vmatpush1.xpose.msra.mxu0 0.0
    %220 = vmatprep.subr.mxu0 0.0
    %221 = vmatpush1.xpose.msra.mxu0 0.0
    %222 = vmatprep.subr.mxu0 0.0
    %223 = vmatpush1.xpose.msra.mxu0 0.0
    %224 = vmatprep.subr.mxu0 0.0
    %225 = vmatpush1.xpose.msra.mxu0 0.0
    %226 = vmatprep.subr.mxu0 0.0
    %227 = vmatpush1.xpose.msra.mxu0 0.0
    %228 = vmatprep.subr.mxu0 0.0
    %229 = vmatpush1.xpose.msra.mxu0 0.0
    %230 = vmatprep.subr.mxu0 0.0
    %231 = vmatpush1.xpose.msra.mxu0 0.0
    %232 = vmatprep.subr.mxu0 0.0
    %233 = vmatpush1.xpose.msra.mxu0 0.0
    %234 = vmatprep.subr.mxu0 0.0
    %235 = vmatpush1.xpose.msra.mxu0 0.0
    %236 = vmatprep.subr.mxu0 0.0
    %237 = vmatpush1.xpose.msra.mxu0 0.0
    %238 = vmatprep.subr.mxu0 0.0
    %239 = vmatpush1.xpose.msra.mxu0 0.0
    %240 = vmatprep.subr.mxu0 0.0
    %241 = vmatpush1.xpose.msra.mxu0 0.0
    %242 = vmatprep.mubr.f32.mxu0 0.0
    %243 = vmatmul.mubr.f32.gmra.mrb[0].mxu0 %v83
    %v244 = vpop.f32.mrb[0].mxu0
    %v245 = vadd.f32 %v79, %v244
    %v246 = vpop.f32.mrb[0].mxu0
    %247 = vmatprep.mubr.f32.mxu0 0.0
    %248 = vmatmul.mubr.f32.gmra.mrb[0].mxu0 %v86
    %v249 = vpop.f32.mrb[0].mxu0
    %v250 = vadd.f32 %v79, %v249
    %v251 = vpop.f32.mrb[0].mxu0
    %252 = vmatprep.mubr.f32.mxu0 0.0
    %253 = vmatmul.mubr.f32.gmra.mrb[0].mxu0 %v89
    %v254 = vpop.f32.mrb[0].mxu0
    %v255 = vadd.f32 %v79, %v254
    %v256 = vpop.f32.mrb[0].mxu0
    %257 = vmatprep.mubr.f32.mxu0 0.0
    %258 = vmatmul.mubr.f32.gmra.mrb[0].mxu0 %v92
    %v259 = vpop.f32.mrb[0].mxu0
    %v260 = vadd.f32 %v79, %v259
    %v261 = vpop.f32.mrb[0].mxu0
    %262 = vmatprep.mubr.f32.mxu0 0.0
    %263 = vmatmul.mubr.f32.gmra.mrb[0].mxu0 %v95
    %v264 = vpop.f32.mrb[0].mxu0
    %v265 = vadd.f32 %v79, %v264
    %v266 = vpop.f32.mrb[0].mxu0
    %267 = vmatprep.mubr.f32.mxu0 0.0
    %268 = vmatmul.mubr.f32.gmra.mrb[0].mxu0 %v98
    %v269 = vpop.f32.mrb[0].mxu0
    %v270 = vadd.f32 %v79, %v269
    %v271 = vpop.f32.mrb[0].mxu0
    %272 = vmatprep.mubr.f32.mxu0 0.0
    %273 = vmatmul.mubr.f32.gmra.mrb[0].mxu0 %v101
    %v274 = vpop.f32.mrb[0].mxu0
    %v275 = vadd.f32 %v79, %v274
    %v276 = vpop.f32.mrb[0].mxu0
    %277 = vmatprep.mubr.f32.mxu0 0.0
    %278 = vmatmul.mubr.f32.gmra.mrb[0].mxu0 %v104
    %v279 = vpop.f32.mrb[0].mxu0
    %v280 = vadd.f32 %v79, %v279
    %v281 = vpop.f32.mrb[0].mxu0
    %282 = vmatprep.mubr.f32.mxu0 0.0
    %283 = vmatmul.mubr.f32.gmra.mrb[0].mxu0 %v107
    %v284 = vpop.f32.mrb[0].mxu0
    %v285 = vadd.f32 %v79, %v284
    %v286 = vpop.f32.mrb[0].mxu0
    %287 = vmatprep.mubr.f32.mxu0 0.0
    %288 = vmatmul.mubr.f32.gmra.mrb[0].mxu0 %v110
    %v289 = vpop.f32.mrb[0].mxu0
    %v290 = vadd.f32 %v79, %v289
    %v291 = vpop.f32.mrb[0].mxu0
    %292 = vmatprep.mubr.f32.mxu0 0.0
    %293 = vmatmul.mubr.f32.gmra.mrb[0].mxu0 %v113
    %v294 = vpop.f32.mrb[0].mxu0
    %v295 = vadd.f32 %v79, %v294
    %v296 = vpop.f32.mrb[0].mxu0
    %297 = vmatprep.mubr.f32.mxu0 0.0
    %298 = vmatmul.mubr.f32.gmra.mrb[0].mxu0 %v116
    %v299 = vpop.f32.mrb[0].mxu0
    %v300 = vadd.f32 %v79, %v299
    %v301 = vpop.f32.mrb[0].mxu0
    %302 = vmatprep.mubr.f32.mxu0 0.0
    %303 = vmatmul.mubr.f32.gmra.mrb[0].mxu0 %v119
    %v304 = vpop.f32.mrb[0].mxu0
    %v305 = vadd.f32 %v79, %v304
    %v306 = vpop.f32.mrb[0].mxu0
    %307 = vmatprep.mubr.f32.mxu0 0.0
    %308 = vmatmul.mubr.f32.gmra.mrb[0].mxu0 %v122
    %v309 = vpop.f32.mrb[0].mxu0
    %v310 = vadd.f32 %v79, %v309
    %v311 = vpop.f32.mrb[0].mxu0
    %312 = vmatprep.mubr.f32.mxu0 0.0
    %313 = vmatmul.mubr.f32.gmra.mrb[0].mxu0 %v125
    %v314 = vpop.f32.mrb[0].mxu0
    %v315 = vadd.f32 %v79, %v314
    %v316 = vpop.f32.mrb[0].mxu0
    %317 = vmatprep.mubr.f32.mxu0 0.0
    %318 = vmatmul.mubr.f32.gmra.mrb[0].mxu0 %v128
    %v319 = vpop.f32.mrb[0].mxu0
    %v320 = vadd.f32 %v79, %v319
    %v321 = vpop.f32.mrb[0].mxu0
    %322 = vdwg.mxu0
    %323 = vst [vmem:[#allocation6] sm:$0xff] %v245
    %324 = vst [vmem:[#allocation6 + $0x8] sm:$0xff] %v250
    %325 = vst [vmem:[#allocation6 + $0x10] sm:$0xff] %v255
    %326 = vst [vmem:[#allocation6 + $0x18] sm:$0xff] %v260
    %327 = vst [vmem:[#allocation6 + $0x20] sm:$0xff] %v265
    %328 = vst [vmem:[#allocation6 + $0x28] sm:$0xff] %v270
    %329 = vst [vmem:[#allocation6 + $0x30] sm:$0xff] %v275
    %330 = vst [vmem:[#allocation6 + $0x38] sm:$0xff] %v280
    %331 = vst [vmem:[#allocation6 + $0x40] sm:$0xff] %v285
    %332 = vst [vmem:[#allocation6 + $0x48] sm:$0xff] %v290
    %333 = vst [vmem:[#allocation6 + $0x50] sm:$0xff] %v295
    %334 = vst [vmem:[#allocation6 + $0x58] sm:$0xff] %v300
    %335 = vst [vmem:[#allocation6 + $0x60] sm:$0xff] %v305
    %336 = vst [vmem:[#allocation6 + $0x68] sm:$0xff] %v310
    %337 = vst [vmem:[#allocation6 + $0x70] sm:$0xff] %v315
    %338 = vst [vmem:[#allocation6 + $0x78] sm:$0xff] %v320
    // Predicated region
    $region22: #{logreg_forward.1} parent=1 // pred_check
      _
    $region23: #{logreg_forward.1} parent=1 // pred_check_branch
      %340 = sbr.rel (0) target = $region25
    $region24: #{logreg_forward.1} parent=1 // pred_region
      // Predicated region
      $region26: #{logreg_forward.1} parent=24 // pred_check
        _
      $region27: #{logreg_forward.1} parent=24 // pred_check_branch
        %342 = sbr.rel (0) target = $region29
      $region28: #{logreg_forward.1} parent=24 // pred_region
        // Predicated region
        $region30: #{logreg_forward.1} parent=28 // pred_check
          _
        $region31: #{logreg_forward.1} parent=28 // pred_check_branch
          %344 = sbr.rel (0) target = $region33
        $region32: #{logreg_forward.1} parent=28 // pred_region
          // Predicated region
          $region45: #{logreg_forward.1} parent=32 // pred_check
            _
          $region46: #{logreg_forward.1} parent=32 // pred_check_branch
            %365 = sbr.rel (0) target = $region48
          $region47: #{logreg_forward.1} parent=32 // pred_region
            loop: start=0, step=1, limit=1
            $region49: #{logreg_forward.1} parent=47 // loop_pre_header
              _
            $region50: #{logreg_forward.1} parent=47 // loop_header
              %s367 = sphi 0, %s371
              %p368 = scmp.ge.s32.totalorder %s367, 1
              %s372 = sphi [#allocation6], [#allocation6]
              %s373 = sphi %s3, %s3
            $region51: #{logreg_forward.1} parent=47 // loop_header_branch
              %370 = sbr.rel (%p368) target = $region55
            $region52: #{logreg_forward.1} parent=47 // loop_body
              %v374 = vld [vmem:[%s372] sm:$0xff]
              %375 = vst [vmem:[%s373] sm:$0xff] %v374
              %v376 = vld [vmem:[%s372 + $0x8] sm:$0xff]
              %377 = vst [vmem:[%s373 + $0x8] sm:$0xff] %v376
              %v378 = vld [vmem:[%s372 + $0x10] sm:$0xff]
              %379 = vst [vmem:[%s373 + $0x10] sm:$0xff] %v378
              %v380 = vld [vmem:[%s372 + $0x18] sm:$0xff]
              %381 = vst [vmem:[%s373 + $0x18] sm:$0xff] %v380
            $region53: #{logreg_forward.1} parent=47 // loop_footer
              %s371 = sadd.s32 1, %s367
            $region54: #{logreg_forward.1} parent=47 // loop_footer_branch
              %366 = sbr.rel target = $region50
            $region55: #{logreg_forward.1} parent=47 // loop_exit
              _
          $region48: #{logreg_forward.1} parent=32 // pred_fallthru
            _
          // Predicated region
          $region56: #{logreg_forward.1} parent=32 // pred_check
            _
          $region57: #{logreg_forward.1} parent=32 // pred_check_branch
            %383 = sbr.rel target = $region59
          $region58: #{logreg_forward.1} parent=32 // pred_region
            _
          $region59: #{logreg_forward.1} parent=32 // pred_fallthru
            _
        $region33: #{logreg_forward.1} parent=28 // pred_fallthru
          _
        // Predicated region
        $region34: #{logreg_forward.1} parent=28 // pred_check
          _
        $region35: #{logreg_forward.1} parent=28 // pred_check_branch
          %346 = sbr.rel target = $region37
        $region36: #{logreg_forward.1} parent=28 // pred_region
          loop: start=0, step=1, limit=1
          $region38: #{logreg_forward.1} parent=36 // loop_pre_header
            _
          $region39: #{logreg_forward.1} parent=36 // loop_header
            %s349 = sphi 0, %s353
            %p350 = scmp.ge.s32.totalorder %s349, 1
            %s354 = sphi [#allocation6], [#allocation6]
            %s355 = sphi %s3, %s3
          $region40: #{logreg_forward.1} parent=36 // loop_header_branch
            %352 = sbr.rel (%p350) target = $region44
          $region41: #{logreg_forward.1} parent=36 // loop_body
            %v356 = vld [vmem:[%s354] sm:$0xff]
            %357 = vst [vmem:[%s355] sm:$0xff] %v356
            %v358 = vld [vmem:[%s354 + $0x8] sm:$0xff]
            %359 = vst [vmem:[%s355 + $0x8] sm:$0xff] %v358
            %v360 = vld [vmem:[%s354 + $0x10] sm:$0xff]
            %361 = vst [vmem:[%s355 + $0x10] sm:$0xff] %v360
            %v362 = vld [vmem:[%s354 + $0x18] sm:$0xff]
            %363 = vst [vmem:[%s355 + $0x18] sm:$0xff] %v362
          $region42: #{logreg_forward.1} parent=36 // loop_footer
            %s353 = sadd.s32 1, %s349
          $region43: #{logreg_forward.1} parent=36 // loop_footer_branch
            %348 = sbr.rel target = $region39
          $region44: #{logreg_forward.1} parent=36 // loop_exit
            _
        $region37: #{logreg_forward.1} parent=28 // pred_fallthru
          _
      $region29: #{logreg_forward.1} parent=24 // pred_fallthru
        _
      %384 = vnop
    $region25: #{logreg_forward.1} parent=1 // pred_fallthru
      _
    // Predicated region
    $region60: #{logreg_forward.1} parent=1 // pred_check
      _
    $region61: #{logreg_forward.1} parent=1 // pred_check_branch
      %386 = sbr.rel (0) target = $region63
    $region62: #{logreg_forward.1} parent=1 // pred_region
      _
    $region63: #{logreg_forward.1} parent=1 // pred_fallthru
      _
    %387 = vsyncpa [#allocation3], 1
    %388 = vsyncpa [#allocation5], 1

</llo_original>
